<compile_context>
chip_gen: v7x
topology: tpu7x:2x2x1
jax: 0.10.0
libtpu: 0.0.40
codegen_flags: <defaults>
</compile_context>

<pallas_src>
import jax
import jax.numpy as jnp
from jax.experimental import pallas as pl
from jax.experimental.pallas import tpu as pltpu

INPUT_DIM = 64
HIDDEN_DIM = 128
OUTPUT_DIM = 1
NUM_LAYERS = 3


def _round_up(x, m):
    return ((x + m - 1) // m) * m


def mlp_kernel(x_ref,
               w0_ref, b0_ref,
               w1_ref, b1_ref,
               w2_ref, b2_ref,
               w3t_ref, b3_ref,
               o_ref):
    # Hidden layers: bf16 operands on the MXU, f32 accumulation, f32 bias+ReLU.
    x = x_ref[...].astype(jnp.bfloat16)            # bf16 cast fused in-kernel
    h = jnp.dot(x, w0_ref[...], preferred_element_type=jnp.float32) + b0_ref[...]
    h = jnp.maximum(h, 0.0).astype(jnp.bfloat16)
    h = jnp.dot(h, w1_ref[...], preferred_element_type=jnp.float32) + b1_ref[...]
    h = jnp.maximum(h, 0.0).astype(jnp.bfloat16)
    h = jnp.dot(h, w2_ref[...], preferred_element_type=jnp.float32) + b2_ref[...]
    h = jnp.maximum(h, 0.0)                        # keep f32 for the final reduce
    # Output layer (HIDDEN -> 1): VPU multiply + cross-lane (XLU) reduction.
    # Keeps the MXU free and yields the compact (tb, 1) column directly
    # (no padded 128-lane f32 store).
    out = jnp.sum(h * w3t_ref[...], axis=-1, keepdims=True) + b3_ref[...]
    o_ref[...] = out.astype(o_ref.dtype)


def _choose_batch_tile(B, tile_b):
    full = _round_up(B, 8)
    if full <= tile_b:
        # Whole batch fits in one tile.  Split large single-tile batches in two
        # so the "parallel" grid axis can occupy both TensorCores on v7x.
        if B >= 512:
            return _round_up((B + 1) // 2, 8)
        return full
    return tile_b


def mlp_forward(x, params, *, tile_b=2048):
    """x: (B, INPUT_DIM) float32. params: list of (W, b), W (in,out), b (1,out).

    Returns (B, OUTPUT_DIM) float32.
    """
    B, D = x.shape
    assert D == INPUT_DIM
    (w0, b0), (w1, b1), (w2, b2), (w3, b3) = params

    tb = _choose_batch_tile(B, tile_b)
    Bp = _round_up(B, tb)
    if Bp != B:
        # Batch padding only (no feature/output padding); zero rows are sliced
        # off below.
        x = jnp.pad(x, ((0, Bp - B), (0, 0)))

    w0_c = w0.astype(jnp.bfloat16)
    w1_c = w1.astype(jnp.bfloat16)
    w2_c = w2.astype(jnp.bfloat16)
    w3t = jnp.transpose(w3)                        # (1, HIDDEN_DIM) f32, VPU path

    resident = lambda arr: pl.BlockSpec(arr.shape, lambda i: (0, 0))

    out = pl.pallas_call(
        mlp_kernel,
        out_shape=jax.ShapeDtypeStruct((Bp, OUTPUT_DIM), jnp.float32),
        grid_spec=pltpu.PrefetchScalarGridSpec(
            num_scalar_prefetch=0,
            grid=(Bp // tb,),
            in_specs=[
                pl.BlockSpec((tb, INPUT_DIM), lambda i: (i, 0)),
                resident(w0_c), resident(b0),
                resident(w1_c), resident(b1),
                resident(w2_c), resident(b2),
                resident(w3t), resident(b3),
            ],
            out_specs=pl.BlockSpec((tb, OUTPUT_DIM), lambda i: (i, 0)),
        ),
        compiler_params=pltpu.CompilerParams(
            dimension_semantics=("parallel",),
            vmem_limit_bytes=32 << 20,
        ),
    )(x, w0_c, b0, w1_c, b1, w2_c, b2, w3t, b3)

    return out[:B] if Bp != B else out


def init_params(key):
    """Deterministic init mimicking nn.Linear default (uniform +-1/sqrt(fan_in))."""
    dims = []
    in_d = INPUT_DIM
    for _ in range(NUM_LAYERS):
        dims.append((in_d, HIDDEN_DIM))
        in_d = HIDDEN_DIM
    dims.append((HIDDEN_DIM, OUTPUT_DIM))

    params = []
    for (fan_in, fan_out) in dims:
        key, kw, kb = jax.random.split(key, 3)
        bound = 1.0 / jnp.sqrt(fan_in)
        W = jax.random.uniform(kw, (fan_in, fan_out), jnp.float32,
                               minval=-bound, maxval=bound)
        b = jax.random.uniform(kb, (1, fan_out), jnp.float32,
                               minval=-bound, maxval=bound)
        params.append((W, b))
    return params


def mlp_reference(x, params):
    """Mirrors the kernel arithmetic (bf16 matmul operands, f32 accumulation,
    f32 final layer)."""
    (w0, b0), (w1, b1), (w2, b2), (w3, b3) = params
    h = x.astype(jnp.bfloat16)
    h = jnp.maximum(jnp.dot(h, w0.astype(jnp.bfloat16),
                            preferred_element_type=jnp.float32) + b0, 0.0)
    h = h.astype(jnp.bfloat16)
    h = jnp.maximum(jnp.dot(h, w1.astype(jnp.bfloat16),
                            preferred_element_type=jnp.float32) + b1, 0.0)
    h = h.astype(jnp.bfloat16)
    h = jnp.maximum(jnp.dot(h, w2.astype(jnp.bfloat16),
                            preferred_element_type=jnp.float32) + b2, 0.0)
    return jnp.dot(h, w3) + b3


if __name__ == "__main__":
    key = jax.random.PRNGKey(0)
    key, kx1, kx2 = jax.random.split(key, 3)
    params = init_params(key)

    # Case 1: small batch, single grid step, no padding.
    x1 = jax.random.normal(kx1, (256, INPUT_DIM), jnp.float32)
    out1 = mlp_forward(x1, params)
    jax.block_until_ready(out1)
    assert out1.shape == (256, OUTPUT_DIM)
    assert jnp.allclose(out1, mlp_reference(x1, params), atol=1e-2, rtol=1e-2), \
        "mismatch vs reference (single tile)"

    # Case 2: batch that is not a tile multiple -> batch padding + 4-step grid.
    x2 = jax.random.normal(kx2, (1000, INPUT_DIM), jnp.float32)
    out2 = mlp_forward(x2, params, tile_b=256)
    jax.block_until_ready(out2)
    assert out2.shape == (1000, OUTPUT_DIM)
    assert jnp.allclose(out2, mlp_reference(x2, params), atol=1e-2, rtol=1e-2), \
        "mismatch vs reference (multi tile)"

    print("KERNEL_OK")
</pallas_src>

<mosaic_0001>
module attributes {stable_mosaic.version = 11 : i64} {
  func.func @mlp_kernel(%arg0: i32, %arg1: memref<256x64xf32, #tpu.memory_space<vmem>>, %arg2: memref<64x128xbf16, #tpu.memory_space<vmem>>, %arg3: memref<1x128xf32, #tpu.memory_space<vmem>>, %arg4: memref<128x128xbf16, #tpu.memory_space<vmem>>, %arg5: memref<1x128xf32, #tpu.memory_space<vmem>>, %arg6: memref<128x128xbf16, #tpu.memory_space<vmem>>, %arg7: memref<1x128xf32, #tpu.memory_space<vmem>>, %arg8: memref<1x128xf32, #tpu.memory_space<vmem>>, %arg9: memref<1x1xf32, #tpu.memory_space<vmem>>, %arg10: memref<256x1xf32, #tpu.memory_space<vmem>>) attributes {dimension_semantics = [#tpu.dimension_semantics<parallel>], iteration_bounds = array<i64: 1>, scalar_prefetch = 0 : i64, scratch_operands = 0 : i64, tpu.core_type = #tpu.core_type<tc>, window_params = [{transform_indices = @transform_0, window_bounds = array<i64: 256, 64>}, {pipeline_mode = #tpu.pipeline_mode<synchronous>, transform_indices = @transform_1, window_bounds = array<i64: 64, 128>}, {pipeline_mode = #tpu.pipeline_mode<synchronous>, transform_indices = @transform_2, window_bounds = array<i64: 1, 128>}, {pipeline_mode = #tpu.pipeline_mode<synchronous>, transform_indices = @transform_3, window_bounds = array<i64: 128, 128>}, {pipeline_mode = #tpu.pipeline_mode<synchronous>, transform_indices = @transform_4, window_bounds = array<i64: 1, 128>}, {pipeline_mode = #tpu.pipeline_mode<synchronous>, transform_indices = @transform_5, window_bounds = array<i64: 128, 128>}, {pipeline_mode = #tpu.pipeline_mode<synchronous>, transform_indices = @transform_6, window_bounds = array<i64: 1, 128>}, {pipeline_mode = #tpu.pipeline_mode<synchronous>, transform_indices = @transform_7, window_bounds = array<i64: 1, 128>}, {pipeline_mode = #tpu.pipeline_mode<synchronous>, transform_indices = @transform_8, window_bounds = array<i64: 1, 1>}, {transform_indices = @transform_9, window_bounds = array<i64: 256, 1>}]} {
    %c0 = arith.constant 0 : index
    %c0_0 = arith.constant 0 : index
    %0 = vector.load %arg1[%c0, %c0_0] : memref<256x64xf32, #tpu.memory_space<vmem>>, vector<256x64xf32>
    %1 = arith.truncf %0 : vector<256x64xf32> to vector<256x64xbf16>
    %c0_1 = arith.constant 0 : index
    %c0_2 = arith.constant 0 : index
    %2 = vector.load %arg2[%c0_1, %c0_2] : memref<64x128xbf16, #tpu.memory_space<vmem>>, vector<64x128xbf16>
    %cst = arith.constant dense<0.000000e+00> : vector<256x128xf32>
    %3 = tpu.matmul %1, %2, %cst {dimension_numbers = #tpu.dot_dimension_numbers<[1], [0], [0], [1], [0, 0, 1, 1], [], []>} : vector<256x64xbf16>, vector<64x128xbf16>, vector<256x128xf32> -> vector<256x128xf32>
    %c0_3 = arith.constant 0 : index
    %c0_4 = arith.constant 0 : index
    %4 = vector.load %arg3[%c0_3, %c0_4] : memref<1x128xf32, #tpu.memory_space<vmem>>, vector<1x128xf32>
    %5 = vector.broadcast %4 : vector<1x128xf32> to vector<256x128xf32>
    %6 = arith.addf %3, %5 : vector<256x128xf32>
    %cst_5 = arith.constant 0.000000e+00 : f32
    %7 = vector.broadcast %cst_5 : f32 to vector<256x128xf32>
    %8 = arith.maximumf %6, %7 : vector<256x128xf32>
    %9 = arith.truncf %8 : vector<256x128xf32> to vector<256x128xbf16>
    %c0_6 = arith.constant 0 : index
    %c0_7 = arith.constant 0 : index
    %10 = vector.load %arg4[%c0_6, %c0_7] : memref<128x128xbf16, #tpu.memory_space<vmem>>, vector<128x128xbf16>
    %cst_8 = arith.constant dense<0.000000e+00> : vector<256x128xf32>
    %11 = tpu.matmul %9, %10, %cst_8 {dimension_numbers = #tpu.dot_dimension_numbers<[1], [0], [0], [1], [0, 0, 1, 1], [], []>} : vector<256x128xbf16>, vector<128x128xbf16>, vector<256x128xf32> -> vector<256x128xf32>
    %c0_9 = arith.constant 0 : index
    %c0_10 = arith.constant 0 : index
    %12 = vector.load %arg5[%c0_9, %c0_10] : memref<1x128xf32, #tpu.memory_space<vmem>>, vector<1x128xf32>
    %13 = vector.broadcast %12 : vector<1x128xf32> to vector<256x128xf32>
    %14 = arith.addf %11, %13 : vector<256x128xf32>
    %cst_11 = arith.constant 0.000000e+00 : f32
    %15 = vector.broadcast %cst_11 : f32 to vector<256x128xf32>
    %16 = arith.maximumf %14, %15 : vector<256x128xf32>
    %17 = arith.truncf %16 : vector<256x128xf32> to vector<256x128xbf16>
    %c0_12 = arith.constant 0 : index
    %c0_13 = arith.constant 0 : index
    %18 = vector.load %arg6[%c0_12, %c0_13] : memref<128x128xbf16, #tpu.memory_space<vmem>>, vector<128x128xbf16>
    %cst_14 = arith.constant dense<0.000000e+00> : vector<256x128xf32>
    %19 = tpu.matmul %17, %18, %cst_14 {dimension_numbers = #tpu.dot_dimension_numbers<[1], [0], [0], [1], [0, 0, 1, 1], [], []>} : vector<256x128xbf16>, vector<128x128xbf16>, vector<256x128xf32> -> vector<256x128xf32>
    %c0_15 = arith.constant 0 : index
    %c0_16 = arith.constant 0 : index
    %20 = vector.load %arg7[%c0_15, %c0_16] : memref<1x128xf32, #tpu.memory_space<vmem>>, vector<1x128xf32>
    %21 = vector.broadcast %20 : vector<1x128xf32> to vector<256x128xf32>
    %22 = arith.addf %19, %21 : vector<256x128xf32>
    %cst_17 = arith.constant 0.000000e+00 : f32
    %23 = vector.broadcast %cst_17 : f32 to vector<256x128xf32>
    %24 = arith.maximumf %22, %23 : vector<256x128xf32>
    %c0_18 = arith.constant 0 : index
    %c0_19 = arith.constant 0 : index
    %25 = vector.load %arg8[%c0_18, %c0_19] : memref<1x128xf32, #tpu.memory_space<vmem>>, vector<1x128xf32>
    %26 = vector.broadcast %25 : vector<1x128xf32> to vector<256x128xf32>
    %27 = arith.mulf %24, %26 : vector<256x128xf32>
    %cst_20 = arith.constant dense<0.000000e+00> : vector<256xf32>
    %28 = vector.multi_reduction <add>, %27, %cst_20 [1] : vector<256x128xf32> to vector<256xf32>
    %29 = vector.shape_cast %28 : vector<256xf32> to vector<256x1xf32>
    %c0_21 = arith.constant 0 : index
    %c0_22 = arith.constant 0 : index
    %30 = vector.load %arg9[%c0_21, %c0_22] : memref<1x1xf32, #tpu.memory_space<vmem>>, vector<1x1xf32>
    %31 = vector.broadcast %30 : vector<1x1xf32> to vector<256x1xf32>
    %32 = arith.addf %29, %31 : vector<256x1xf32>
    %c0_23 = arith.constant 0 : index
    %c0_24 = arith.constant 0 : index
    %33 = vector.load %arg10[%c0_23, %c0_24] : memref<256x1xf32, #tpu.memory_space<vmem>>, vector<256x1xf32>
    tpu.vector_store %arg10[%c0_23, %c0_24], %32 {strides = array<i32>} : memref<256x1xf32, #tpu.memory_space<vmem>>, vector<256x1xf32>,
    return
  }
  func.func @transform_0(%arg0: i32) -> (i32, i32) {
    %c0_i32 = arith.constant 0 : i32
    %c0_i32_0 = arith.constant 0 : i32
    return %arg0, %c0_i32 : i32, i32
  }
  func.func @transform_1(%arg0: i32) -> (i32, i32) {
    %c0_i32 = arith.constant 0 : i32
    %c0_i32_0 = arith.constant 0 : i32
    %c0_i32_1 = arith.constant 0 : i32
    return %c0_i32, %c0_i32_0 : i32, i32
  }
  func.func @transform_2(%arg0: i32) -> (i32, i32) {
    %c0_i32 = arith.constant 0 : i32
    %c0_i32_0 = arith.constant 0 : i32
    %c0_i32_1 = arith.constant 0 : i32
    return %c0_i32, %c0_i32_0 : i32, i32
  }
  func.func @transform_3(%arg0: i32) -> (i32, i32) {
    %c0_i32 = arith.constant 0 : i32
    %c0_i32_0 = arith.constant 0 : i32
    %c0_i32_1 = arith.constant 0 : i32
    return %c0_i32, %c0_i32_0 : i32, i32
  }
  func.func @transform_4(%arg0: i32) -> (i32, i32) {
    %c0_i32 = arith.constant 0 : i32
    %c0_i32_0 = arith.constant 0 : i32
    %c0_i32_1 = arith.constant 0 : i32
    return %c0_i32, %c0_i32_0 : i32, i32
  }
  func.func @transform_5(%arg0: i32) -> (i32, i32) {
    %c0_i32 = arith.constant 0 : i32
    %c0_i32_0 = arith.constant 0 : i32
    %c0_i32_1 = arith.constant 0 : i32
    return %c0_i32, %c0_i32_0 : i32, i32
  }
  func.func @transform_6(%arg0: i32) -> (i32, i32) {
    %c0_i32 = arith.constant 0 : i32
    %c0_i32_0 = arith.constant 0 : i32
    %c0_i32_1 = arith.constant 0 : i32
    return %c0_i32, %c0_i32_0 : i32, i32
  }
  func.func @transform_7(%arg0: i32) -> (i32, i32) {
    %c0_i32 = arith.constant 0 : i32
    %c0_i32_0 = arith.constant 0 : i32
    %c0_i32_1 = arith.constant 0 : i32
    return %c0_i32, %c0_i32_0 : i32, i32
  }
  func.func @transform_8(%arg0: i32) -> (i32, i32) {
    %c0_i32 = arith.constant 0 : i32
    %c0_i32_0 = arith.constant 0 : i32
    %c0_i32_1 = arith.constant 0 : i32
    return %c0_i32, %c0_i32_0 : i32, i32
  }
  func.func @transform_9(%arg0: i32) -> (i32, i32) {
    %c0_i32 = arith.constant 0 : i32
    %c0_i32_0 = arith.constant 0 : i32
    return %arg0, %c0_i32 : i32, i32
  }
}

</mosaic_0001>

<llo_original>
// kernel: tpu_custom_call.1
$region0: #{tpu_custom_call.1}
  #allocation0 [shape = 'u32[]', space=smem, size = 0x4, offset = 0x4, fixed_abs, tag = 'smem constant byte address 0x4 - core index']
  #allocation1 [shape = 'u32[144,128]{1,0:T(1,128)}', space=vmem, size = 0x12000, scoped, tag = 'internal scratch']
  #allocation2 [shape = 'f32[1,1]{1,0:T(1,128)S(1)}', space=vmem, size = 0x200, scoped, tag = 'scoped memory for tpu_custom_call.1']
  %s0 = inlined_call_operand.vmem [shape: f32[256,64], index: 0, kind: input, shape index: {}]
  %s1 = inlined_call_operand.vmem [shape: bf16[64,128], index: 1, kind: input, shape index: {}]
  %s2 = inlined_call_operand.vmem [shape: f32[1,128], index: 2, kind: input, shape index: {}]
  %s3 = inlined_call_operand.vmem [shape: bf16[128,128], index: 3, kind: input, shape index: {}]
  %s4 = inlined_call_operand.vmem [shape: f32[1,128], index: 4, kind: input, shape index: {}]
  %s5 = inlined_call_operand.vmem [shape: bf16[128,128], index: 5, kind: input, shape index: {}]
  %s6 = inlined_call_operand.vmem [shape: f32[1,128], index: 6, kind: input, shape index: {}]
  %s7 = inlined_call_operand.vmem [shape: f32[1,128], index: 7, kind: input, shape index: {}]
  %s8 = inlined_call_operand.<no memory space> [shape: f32[1,1], index: 8, kind: input, shape index: {}]
  %s9 = inlined_call_operand.vmem [shape: f32[256,1], index: 9, kind: output, shape index: {}]
  %s10 = sld [smem:[#allocation0]]
  $region46: #{tpu_custom_call.1} parent=0
    _
  %s12 = ssub.s32 1, %s10
  %s13 = scalar_select 0, %s12, %s10
  %v14 = vstv %s8
  %15 = vst [vmem:[#allocation2] sm:$0x1] %v14
  // Predicated region
  $region2: #{tpu_custom_call.1} parent=0 // pred_check
    _
  $region3: #{tpu_custom_call.1} parent=0 // pred_check_branch
    %17 = sbr.rel (0) target = $region5
  $region4: #{tpu_custom_call.1} parent=0 // pred_region
    _
  $region5: #{tpu_custom_call.1} parent=0 // pred_fallthru
    _
  // Predicated region
  $region6: #{tpu_custom_call.1} parent=0 // pred_check
    _
  $region7: #{tpu_custom_call.1} parent=0 // pred_check_branch
    %19 = sbr.rel (0) target = $region9
  $region8: #{tpu_custom_call.1} parent=0 // pred_region
    _
  $region9: #{tpu_custom_call.1} parent=0 // pred_fallthru
    _
  // Predicated region
  $region10: #{tpu_custom_call.1} parent=0 // pred_check
    _
  $region11: #{tpu_custom_call.1} parent=0 // pred_check_branch
    %21 = sbr.rel (0) target = $region13
  $region12: #{tpu_custom_call.1} parent=0 // pred_region
    _
  $region13: #{tpu_custom_call.1} parent=0 // pred_fallthru
    _
  // Predicated region
  $region14: #{tpu_custom_call.1} parent=0 // pred_check
    _
  $region15: #{tpu_custom_call.1} parent=0 // pred_check_branch
    %23 = sbr.rel (0) target = $region17
  $region16: #{tpu_custom_call.1} parent=0 // pred_region
    _
  $region17: #{tpu_custom_call.1} parent=0 // pred_fallthru
    _
  // Predicated region
  $region18: #{tpu_custom_call.1} parent=0 // pred_check
    _
  $region19: #{tpu_custom_call.1} parent=0 // pred_check_branch
    %25 = sbr.rel (0) target = $region21
  $region20: #{tpu_custom_call.1} parent=0 // pred_region
    _
  $region21: #{tpu_custom_call.1} parent=0 // pred_fallthru
    _
  // Predicated region
  $region22: #{tpu_custom_call.1} parent=0 // pred_check
    _
  $region23: #{tpu_custom_call.1} parent=0 // pred_check_branch
    %27 = sbr.rel (0) target = $region25
  $region24: #{tpu_custom_call.1} parent=0 // pred_region
    _
  $region25: #{tpu_custom_call.1} parent=0 // pred_fallthru
    _
  // Predicated region
  $region26: #{tpu_custom_call.1} parent=0 // pred_check
    _
  $region27: #{tpu_custom_call.1} parent=0 // pred_check_branch
    %29 = sbr.rel (0) target = $region29
  $region28: #{tpu_custom_call.1} parent=0 // pred_region
    _
  $region29: #{tpu_custom_call.1} parent=0 // pred_fallthru
    _
  // Predicated region
  $region30: #{tpu_custom_call.1} parent=0 // pred_check
    _
  $region31: #{tpu_custom_call.1} parent=0 // pred_check_branch
    %31 = sbr.rel (0) target = $region33
  $region32: #{tpu_custom_call.1} parent=0 // pred_region
    _
  $region33: #{tpu_custom_call.1} parent=0 // pred_fallthru
    _
  // Predicated region
  $region34: #{tpu_custom_call.1} parent=0 // pred_check
    _
  $region35: #{tpu_custom_call.1} parent=0 // pred_check_branch
    %33 = sbr.rel (0) target = $region37
  $region36: #{tpu_custom_call.1} parent=0 // pred_region
    _
  $region37: #{tpu_custom_call.1} parent=0 // pred_fallthru
    _
  %v35 = vld [vmem:[%s0] sm:$0xff]
  %v36 = vld [vmem:[%s0 + $0x8] sm:$0xff]
  %v37 = vld [vmem:[%s0 + $0x10] sm:$0xff]
  %v38 = vld [vmem:[%s0 + $0x18] sm:$0xff]
  %v39 = vld [vmem:[%s0 + $0x20] sm:$0xff]
  %v40 = vld [vmem:[%s0 + $0x28] sm:$0xff]
  %v41 = vld [vmem:[%s0 + $0x30] sm:$0xff]
  %v42 = vld [vmem:[%s0 + $0x38] sm:$0xff]
  %v43 = vld [vmem:[%s0 + $0x40] sm:$0xff]
  %v44 = vld [vmem:[%s0 + $0x48] sm:$0xff]
  %v45 = vld [vmem:[%s0 + $0x50] sm:$0xff]
  %v46 = vld [vmem:[%s0 + $0x58] sm:$0xff]
  %v47 = vld [vmem:[%s0 + $0x60] sm:$0xff]
  %v48 = vld [vmem:[%s0 + $0x68] sm:$0xff]
  %v49 = vld [vmem:[%s0 + $0x70] sm:$0xff]
  %v50 = vld [vmem:[%s0 + $0x78] sm:$0xff]
  %v51 = vld [vmem:[%s0 + $0x80] sm:$0xff]
  %v52 = vld [vmem:[%s0 + $0x88] sm:$0xff]
  %v53 = vld [vmem:[%s0 + $0x90] sm:$0xff]
  %v54 = vld [vmem:[%s0 + $0x98] sm:$0xff]
  %v55 = vld [vmem:[%s0 + $0xa0] sm:$0xff]
  %v56 = vld [vmem:[%s0 + $0xa8] sm:$0xff]
  %v57 = vld [vmem:[%s0 + $0xb0] sm:$0xff]
  %v58 = vld [vmem:[%s0 + $0xb8] sm:$0xff]
  %v59 = vld [vmem:[%s0 + $0xc0] sm:$0xff]
  %v60 = vld [vmem:[%s0 + $0xc8] sm:$0xff]
  %v61 = vld [vmem:[%s0 + $0xd0] sm:$0xff]
  %v62 = vld [vmem:[%s0 + $0xd8] sm:$0xff]
  %v63 = vld [vmem:[%s0 + $0xe0] sm:$0xff]
  %v64 = vld [vmem:[%s0 + $0xe8] sm:$0xff]
  %v65 = vld [vmem:[%s0 + $0xf0] sm:$0xff]
  %v66 = vld [vmem:[%s0 + $0xf8] sm:$0xff]
  %v67 = vpack.c.bf16 %v36, %v35
  %v68 = vpack.c.bf16 %v38, %v37
  %v69 = vpack.c.bf16 %v40, %v39
  %v70 = vpack.c.bf16 %v42, %v41
  %v71 = vpack.c.bf16 %v44, %v43
  %v72 = vpack.c.bf16 %v46, %v45
  %v73 = vpack.c.bf16 %v48, %v47
  %v74 = vpack.c.bf16 %v50, %v49
  %v75 = vpack.c.bf16 %v52, %v51
  %v76 = vpack.c.bf16 %v54, %v53
  %v77 = vpack.c.bf16 %v56, %v55
  %v78 = vpack.c.bf16 %v58, %v57
  %v79 = vpack.c.bf16 %v60, %v59
  %v80 = vpack.c.bf16 %v62, %v61
  %v81 = vpack.c.bf16 %v64, %v63
  %v82 = vpack.c.bf16 %v66, %v65
  %v83 = vld [vmem:[%s1] sm:$0xf]
  %v84 = vld [vmem:[%s1 + $0x4] sm:$0xf]
  %v85 = vld [vmem:[%s1 + $0x8] sm:$0xf]
  %v86 = vld [vmem:[%s1 + $0xc] sm:$0xf]
  %v87 = vld [vmem:[%s1 + $0x10] sm:$0xf]
  %v88 = vld [vmem:[%s1 + $0x14] sm:$0xf]
  %v89 = vld [vmem:[%s1 + $0x18] sm:$0xf]
  %v90 = vld [vmem:[%s1 + $0x1c] sm:$0xf]
  %v91 = vld [vmem:[%s2] sm:$0x1]
  %v93 = vlaneseq
  %v94 = vshrl.u32 %v93, 7
  %v95 = vsub.s32 0, %v94
  %v96 = vrot.slane %v91, %v95
  %v106 = vunpack.c.l.b16 %v83
  %v107 = vunpack.c.l.b16 %v84
  %v108 = vunpack.c.l.b16 %v85
  %v109 = vunpack.c.l.b16 %v86
  %v110 = vunpack.c.l.b16 %v87
  %v111 = vunpack.c.l.b16 %v88
  %v112 = vunpack.c.l.b16 %v89
  %v113 = vunpack.c.l.b16 %v90
  %v114 = vpack.c.b16 %v107, %v106
  %v115 = vpack.c.b16 %v109, %v108
  %v116 = vpack.c.b16 %v111, %v110
  %v117 = vpack.c.b16 %v113, %v112
  %vm122 = vcmask 523264
  %v124 = vsel %vm122, %v67, 0
  %v127 = vsel %vm122, %v68, 0
  %v130 = vsel %vm122, %v69, 0
  %v133 = vsel %vm122, %v70, 0
  %v136 = vsel %vm122, %v71, 0
  %v139 = vsel %vm122, %v72, 0
  %v142 = vsel %vm122, %v73, 0
  %v145 = vsel %vm122, %v74, 0
  %v148 = vsel %vm122, %v75, 0
  %v151 = vsel %vm122, %v76, 0
  %v154 = vsel %vm122, %v77, 0
  %v157 = vsel %vm122, %v78, 0
  %v160 = vsel %vm122, %v79, 0
  %v163 = vsel %vm122, %v80, 0
  %v166 = vsel %vm122, %v81, 0
  %v169 = vsel %vm122, %v82, 0
  %171 = vmatprep.subr.bf16.mxu0 0
  %172 = vmatpush1.bf16.msra.mxu0 %v114
  %173 = vmatprep.subr.bf16.mxu0 0
  %174 = vmatpush1.bf16.msra.mxu0 %v115
  %175 = vmatprep.subr.bf16.mxu0 0
  %176 = vmatpush1.bf16.msra.mxu0 %v116
  %177 = vmatprep.subr.bf16.mxu0 0
  %178 = vmatpush1.bf16.msra.mxu0 %v117
  %179 = vmatprep.subr.bf16.mxu0 0
  %180 = vmatpush1.bf16.msra.mxu0 0
  %181 = vmatprep.subr.bf16.mxu0 0
  %182 = vmatpush1.bf16.msra.mxu0 0
  %183 = vmatprep.subr.bf16.mxu0 0
  %184 = vmatpush1.bf16.msra.mxu0 0
  %185 = vmatprep.subr.bf16.mxu0 0
  %186 = vmatpush1.bf16.msra.mxu0 0
  %187 = vmatprep.subr.bf16.mxu0 0
  %188 = vmatpush1.bf16.msra.mxu0 0
  %189 = vmatprep.subr.bf16.mxu0 0
  %190 = vmatpush1.bf16.msra.mxu0 0
  %191 = vmatprep.subr.bf16.mxu0 0
  %192 = vmatpush1.bf16.msra.mxu0 0
  %193 = vmatprep.subr.bf16.mxu0 0
  %194 = vmatpush1.bf16.msra.mxu0 0
  %195 = vmatprep.subr.bf16.mxu0 0
  %196 = vmatpush1.bf16.msra.mxu0 0
  %197 = vmatprep.subr.bf16.mxu0 0
  %198 = vmatpush1.bf16.msra.mxu0 0
  %199 = vmatprep.subr.bf16.mxu0 0
  %200 = vmatpush1.bf16.msra.mxu0 0
  %201 = vmatprep.subr.bf16.mxu0 0
  %202 = vmatpush1.bf16.msra.mxu0 0
  %203 = vmatprep.mubr.bf16.mxu0 0
  %204 = vmatmul.mubr.bf16.gmra.mrb[0].mxu0 %v124
  %v205 = vpop.f32.mrb[0].mxu0
  %v206 = vadd.f32 %v96, %v205
  %v207 = vpop.f32.mrb[0].mxu0
  %v208 = vpop.f32.mrb[0].mxu0
  %v209 = vadd.f32 %v96, %v208
  %v210 = vpop.f32.mrb[0].mxu0
  %211 = vmatprep.mubr.bf16.mxu0 0
  %212 = vmatmul.mubr.bf16.gmra.mrb[0].mxu0 %v127
  %v213 = vpop.f32.mrb[0].mxu0
  %v214 = vadd.f32 %v96, %v213
  %v215 = vpop.f32.mrb[0].mxu0
  %v216 = vpop.f32.mrb[0].mxu0
  %v217 = vadd.f32 %v96, %v216
  %v218 = vpop.f32.mrb[0].mxu0
  %219 = vmatprep.mubr.bf16.mxu0 0
  %220 = vmatmul.mubr.bf16.gmra.mrb[0].mxu0 %v130
  %v221 = vpop.f32.mrb[0].mxu0
  %v222 = vadd.f32 %v96, %v221
  %v223 = vpop.f32.mrb[0].mxu0
  %v224 = vpop.f32.mrb[0].mxu0
  %v225 = vadd.f32 %v96, %v224
  %v226 = vpop.f32.mrb[0].mxu0
  %227 = vmatprep.mubr.bf16.mxu0 0
  %228 = vmatmul.mubr.bf16.gmra.mrb[0].mxu0 %v133
  %v229 = vpop.f32.mrb[0].mxu0
  %v230 = vadd.f32 %v96, %v229
  %v231 = vpop.f32.mrb[0].mxu0
  %v232 = vpop.f32.mrb[0].mxu0
  %v233 = vadd.f32 %v96, %v232
  %v234 = vpop.f32.mrb[0].mxu0
  %235 = vmatprep.mubr.bf16.mxu0 0
  %236 = vmatmul.mubr.bf16.gmra.mrb[0].mxu0 %v136
  %v237 = vpop.f32.mrb[0].mxu0
  %v238 = vadd.f32 %v96, %v237
  %v239 = vpop.f32.mrb[0].mxu0
  %v240 = vpop.f32.mrb[0].mxu0
  %v241 = vadd.f32 %v96, %v240
  %v242 = vpop.f32.mrb[0].mxu0
  %243 = vmatprep.mubr.bf16.mxu0 0
  %244 = vmatmul.mubr.bf16.gmra.mrb[0].mxu0 %v139
  %v245 = vpop.f32.mrb[0].mxu0
  %v246 = vadd.f32 %v96, %v245
  %v247 = vpop.f32.mrb[0].mxu0
  %v248 = vpop.f32.mrb[0].mxu0
  %v249 = vadd.f32 %v96, %v248
  %v250 = vpop.f32.mrb[0].mxu0
  %251 = vmatprep.mubr.bf16.mxu0 0
  %252 = vmatmul.mubr.bf16.gmra.mrb[0].mxu0 %v142
  %v253 = vpop.f32.mrb[0].mxu0
  %v254 = vadd.f32 %v96, %v253
  %v255 = vpop.f32.mrb[0].mxu0
  %v256 = vpop.f32.mrb[0].mxu0
  %v257 = vadd.f32 %v96, %v256
  %v258 = vpop.f32.mrb[0].mxu0
  %259 = vmatprep.mubr.bf16.mxu0 0
  %260 = vmatmul.mubr.bf16.gmra.mrb[0].mxu0 %v145
  %v261 = vpop.f32.mrb[0].mxu0
  %v262 = vadd.f32 %v96, %v261
  %v263 = vpop.f32.mrb[0].mxu0
  %v264 = vpop.f32.mrb[0].mxu0
  %v265 = vadd.f32 %v96, %v264
  %v266 = vpop.f32.mrb[0].mxu0
  %267 = vmatprep.mubr.bf16.mxu0 0
  %268 = vmatmul.mubr.bf16.gmra.mrb[0].mxu0 %v148
  %v269 = vpop.f32.mrb[0].mxu0
  %v270 = vadd.f32 %v96, %v269
  %v271 = vpop.f32.mrb[0].mxu0
  %v272 = vpop.f32.mrb[0].mxu0
  %v273 = vadd.f32 %v96, %v272
  %v274 = vpop.f32.mrb[0].mxu0
  %275 = vmatprep.mubr.bf16.mxu0 0
  %276 = vmatmul.mubr.bf16.gmra.mrb[0].mxu0 %v151
  %v277 = vpop.f32.mrb[0].mxu0
  %v278 = vadd.f32 %v96, %v277
  %v279 = vpop.f32.mrb[0].mxu0
  %v280 = vpop.f32.mrb[0].mxu0
  %v281 = vadd.f32 %v96, %v280
  %v282 = vpop.f32.mrb[0].mxu0
  %283 = vmatprep.mubr.bf16.mxu0 0
  %284 = vmatmul.mubr.bf16.gmra.mrb[0].mxu0 %v154
  %v285 = vpop.f32.mrb[0].mxu0
  %v286 = vadd.f32 %v96, %v285
  %v287 = vpop.f32.mrb[0].mxu0
  %v288 = vpop.f32.mrb[0].mxu0
  %v289 = vadd.f32 %v96, %v288
  %v290 = vpop.f32.mrb[0].mxu0
  %291 = vmatprep.mubr.bf16.mxu0 0
  %292 = vmatmul.mubr.bf16.gmra.mrb[0].mxu0 %v157
  %v293 = vpop.f32.mrb[0].mxu0
  %v294 = vadd.f32 %v96, %v293
  %v295 = vpop.f32.mrb[0].mxu0
  %v296 = vpop.f32.mrb[0].mxu0
  %v297 = vadd.f32 %v96, %v296
  %v298 = vpop.f32.mrb[0].mxu0
  %299 = vmatprep.mubr.bf16.mxu0 0
  %300 = vmatmul.mubr.bf16.gmra.mrb[0].mxu0 %v160
  %v301 = vpop.f32.mrb[0].mxu0
  %v302 = vadd.f32 %v96, %v301
  %v303 = vpop.f32.mrb[0].mxu0
  %v304 = vpop.f32.mrb[0].mxu0
  %v305 = vadd.f32 %v96, %v304
  %v306 = vpop.f32.mrb[0].mxu0
  %307 = vmatprep.mubr.bf16.mxu0 0
  %308 = vmatmul.mubr.bf16.gmra.mrb[0].mxu0 %v163
  %v309 = vpop.f32.mrb[0].mxu0
  %v310 = vadd.f32 %v96, %v309
  %v311 = vpop.f32.mrb[0].mxu0
  %v312 = vpop.f32.mrb[0].mxu0
  %v313 = vadd.f32 %v96, %v312
  %v314 = vpop.f32.mrb[0].mxu0
  %315 = vmatprep.mubr.bf16.mxu0 0
  %316 = vmatmul.mubr.bf16.gmra.mrb[0].mxu0 %v166
  %v317 = vpop.f32.mrb[0].mxu0
  %v318 = vadd.f32 %v96, %v317
  %v319 = vpop.f32.mrb[0].mxu0
  %v320 = vpop.f32.mrb[0].mxu0
  %v321 = vadd.f32 %v96, %v320
  %v322 = vpop.f32.mrb[0].mxu0
  %323 = vmatprep.mubr.bf16.mxu0 0
  %324 = vmatmul.mubr.bf16.gmra.mrb[0].mxu0 %v169
  %v325 = vpop.f32.mrb[0].mxu0
  %v326 = vadd.f32 %v96, %v325
  %v327 = vpop.f32.mrb[0].mxu0
  %v328 = vpop.f32.mrb[0].mxu0
  %v329 = vadd.f32 %v96, %v328
  %v330 = vpop.f32.mrb[0].mxu0
  %331 = vdwg.mxu0
  %v332 = vmax.f32 %v206, 0.0
  %v333 = vmax.f32 %v209, 0.0
  %v334 = vmax.f32 %v214, 0.0
  %v335 = vmax.f32 %v217, 0.0
  %v336 = vmax.f32 %v222, 0.0
  %v337 = vmax.f32 %v225, 0.0
  %v338 = vmax.f32 %v230, 0.0
  %v339 = vmax.f32 %v233, 0.0
  %v340 = vmax.f32 %v238, 0.0
  %v341 = vmax.f32 %v241, 0.0
  %v342 = vmax.f32 %v246, 0.0
  %v343 = vmax.f32 %v249, 0.0
  %v344 = vmax.f32 %v254, 0.0
  %v345 = vmax.f32 %v257, 0.0
  %v346 = vmax.f32 %v262, 0.0
  %v347 = vmax.f32 %v265, 0.0
  %v348 = vmax.f32 %v270, 0.0
  %v349 = vmax.f32 %v273, 0.0
  %v350 = vmax.f32 %v278, 0.0
  %v351 = vmax.f32 %v281, 0.0
  %v352 = vmax.f32 %v286, 0.0
  %v353 = vmax.f32 %v289, 0.0
  %v354 = vmax.f32 %v294, 0.0
  %v355 = vmax.f32 %v297, 0.0
  %v356 = vmax.f32 %v302, 0.0
  %v357 = vmax.f32 %v305, 0.0
  %v358 = vmax.f32 %v310, 0.0
  %v359 = vmax.f32 %v313, 0.0
  %v360 = vmax.f32 %v318, 0.0
  %v361 = vmax.f32 %v321, 0.0
  %v362 = vmax.f32 %v326, 0.0
  %v363 = vmax.f32 %v329, 0.0
  %v364 = vpack.c.bf16 %v333, %v332
  %v365 = vpack.c.bf16 %v335, %v334
  %v366 = vpack.c.bf16 %v337, %v336
  %v367 = vpack.c.bf16 %v339, %v338
  %v368 = vpack.c.bf16 %v341, %v340
  %v369 = vpack.c.bf16 %v343, %v342
  %v370 = vpack.c.bf16 %v345, %v344
  %v371 = vpack.c.bf16 %v347, %v346
  %v372 = vpack.c.bf16 %v349, %v348
  %v373 = vpack.c.bf16 %v351, %v350
  %v374 = vpack.c.bf16 %v353, %v352
  %v375 = vpack.c.bf16 %v355, %v354
  %v376 = vpack.c.bf16 %v357, %v356
  %v377 = vpack.c.bf16 %v359, %v358
  %v378 = vpack.c.bf16 %v361, %v360
  %v379 = vpack.c.bf16 %v363, %v362
  %v380 = vld [vmem:[%s3] sm:$0xf]
  %v381 = vld [vmem:[%s3 + $0x4] sm:$0xf]
  %v382 = vld [vmem:[%s3 + $0x8] sm:$0xf]
  %v383 = vld [vmem:[%s3 + $0xc] sm:$0xf]
  %v384 = vld [vmem:[%s3 + $0x10] sm:$0xf]
  %v385 = vld [vmem:[%s3 + $0x14] sm:$0xf]
  %v386 = vld [vmem:[%s3 + $0x18] sm:$0xf]
  %v387 = vld [vmem:[%s3 + $0x1c] sm:$0xf]
  %v388 = vld [vmem:[%s3 + $0x20] sm:$0xf]
  %v389 = vld [vmem:[%s3 + $0x24] sm:$0xf]
  %v390 = vld [vmem:[%s3 + $0x28] sm:$0xf]
  %v391 = vld [vmem:[%s3 + $0x2c] sm:$0xf]
  %v392 = vld [vmem:[%s3 + $0x30] sm:$0xf]
  %v393 = vld [vmem:[%s3 + $0x34] sm:$0xf]
  %v394 = vld [vmem:[%s3 + $0x38] sm:$0xf]
  %v395 = vld [vmem:[%s3 + $0x3c] sm:$0xf]
  %v396 = vld [vmem:[%s4] sm:$0x1]
  %v398 = vlaneseq
  %v399 = vshrl.u32 %v398, 7
  %v400 = vsub.s32 0, %v399
  %v401 = vrot.slane %v396, %v400
  %v419 = vunpack.c.l.b16 %v380
  %v420 = vunpack.c.l.b16 %v381
  %v421 = vunpack.c.l.b16 %v382
  %v422 = vunpack.c.l.b16 %v383
  %v423 = vunpack.c.l.b16 %v384
  %v424 = vunpack.c.l.b16 %v385
  %v425 = vunpack.c.l.b16 %v386
  %v426 = vunpack.c.l.b16 %v387
  %v427 = vunpack.c.l.b16 %v388
  %v428 = vunpack.c.l.b16 %v389
  %v429 = vunpack.c.l.b16 %v390
  %v430 = vunpack.c.l.b16 %v391
  %v431 = vunpack.c.l.b16 %v392
  %v432 = vunpack.c.l.b16 %v393
  %v433 = vunpack.c.l.b16 %v394
  %v434 = vunpack.c.l.b16 %v395
  %v435 = vpack.c.b16 %v420, %v419
  %v436 = vpack.c.b16 %v422, %v421
  %v437 = vpack.c.b16 %v424, %v423
  %v438 = vpack.c.b16 %v426, %v425
  %v439 = vpack.c.b16 %v428, %v427
  %v440 = vpack.c.b16 %v430, %v429
  %v441 = vpack.c.b16 %v432, %v431
  %v442 = vpack.c.b16 %v434, %v433
  %451 = vmatprep.subr.bf16.mxu0 0
  %452 = vmatpush1.bf16.msra.mxu0 %v435
  %453 = vmatprep.subr.bf16.mxu0 0
  %454 = vmatpush1.bf16.msra.mxu0 %v436
  %455 = vmatprep.subr.bf16.mxu0 0
  %456 = vmatpush1.bf16.msra.mxu0 %v437
  %457 = vmatprep.subr.bf16.mxu0 0
  %458 = vmatpush1.bf16.msra.mxu0 %v438
  %459 = vmatprep.subr.bf16.mxu0 0
  %460 = vmatpush1.bf16.msra.mxu0 %v439
  %461 = vmatprep.subr.bf16.mxu0 0
  %462 = vmatpush1.bf16.msra.mxu0 %v440
  %463 = vmatprep.subr.bf16.mxu0 0
  %464 = vmatpush1.bf16.msra.mxu0 %v441
  %465 = vmatprep.subr.bf16.mxu0 0
  %466 = vmatpush1.bf16.msra.mxu0 %v442
  %467 = vmatprep.subr.bf16.mxu0 0
  %468 = vmatpush1.bf16.msra.mxu0 0
  %469 = vmatprep.subr.bf16.mxu0 0
  %470 = vmatpush1.bf16.msra.mxu0 0
  %471 = vmatprep.subr.bf16.mxu0 0
  %472 = vmatpush1.bf16.msra.mxu0 0
  %473 = vmatprep.subr.bf16.mxu0 0
  %474 = vmatpush1.bf16.msra.mxu0 0
  %475 = vmatprep.subr.bf16.mxu0 0
  %476 = vmatpush1.bf16.msra.mxu0 0
  %477 = vmatprep.subr.bf16.mxu0 0
  %478 = vmatpush1.bf16.msra.mxu0 0
  %479 = vmatprep.subr.bf16.mxu0 0
  %480 = vmatpush1.bf16.msra.mxu0 0
  %481 = vmatprep.subr.bf16.mxu0 0
  %482 = vmatpush1.bf16.msra.mxu0 0
  %483 = vmatprep.mubr.bf16.mxu0 0
  %484 = vmatmul.mubr.bf16.gmra.mrb[0].mxu0 %v364
  %v485 = vpop.f32.mrb[0].mxu0
  %v486 = vadd.f32 %v401, %v485
  %v487 = vpop.f32.mrb[0].mxu0
  %v488 = vpop.f32.mrb[0].mxu0
  %v489 = vadd.f32 %v401, %v488
  %v490 = vpop.f32.mrb[0].mxu0
  %491 = vmatprep.mubr.bf16.mxu0 0
  %492 = vmatmul.mubr.bf16.gmra.mrb[0].mxu0 %v365
  %v493 = vpop.f32.mrb[0].mxu0
  %v494 = vadd.f32 %v401, %v493
  %v495 = vpop.f32.mrb[0].mxu0
  %v496 = vpop.f32.mrb[0].mxu0
  %v497 = vadd.f32 %v401, %v496
  %v498 = vpop.f32.mrb[0].mxu0
  %499 = vmatprep.mubr.bf16.mxu0 0
  %500 = vmatmul.mubr.bf16.gmra.mrb[0].mxu0 %v366
  %v501 = vpop.f32.mrb[0].mxu0
  %v502 = vadd.f32 %v401, %v501
  %v503 = vpop.f32.mrb[0].mxu0
  %v504 = vpop.f32.mrb[0].mxu0
  %v505 = vadd.f32 %v401, %v504
  %v506 = vpop.f32.mrb[0].mxu0
  %507 = vmatprep.mubr.bf16.mxu0 0
  %508 = vmatmul.mubr.bf16.gmra.mrb[0].mxu0 %v367
  %v509 = vpop.f32.mrb[0].mxu0
  %v510 = vadd.f32 %v401, %v509
  %v511 = vpop.f32.mrb[0].mxu0
  %v512 = vpop.f32.mrb[0].mxu0
  %v513 = vadd.f32 %v401, %v512
  %v514 = vpop.f32.mrb[0].mxu0
  %515 = vmatprep.mubr.bf16.mxu0 0
  %516 = vmatmul.mubr.bf16.gmra.mrb[0].mxu0 %v368
  %v517 = vpop.f32.mrb[0].mxu0
  %v518 = vadd.f32 %v401, %v517
  %v519 = vpop.f32.mrb[0].mxu0
  %v520 = vpop.f32.mrb[0].mxu0
  %v521 = vadd.f32 %v401, %v520
  %v522 = vpop.f32.mrb[0].mxu0
  %523 = vmatprep.mubr.bf16.mxu0 0
  %524 = vmatmul.mubr.bf16.gmra.mrb[0].mxu0 %v369
  %v525 = vpop.f32.mrb[0].mxu0
  %v526 = vadd.f32 %v401, %v525
  %v527 = vpop.f32.mrb[0].mxu0
  %v528 = vpop.f32.mrb[0].mxu0
  %v529 = vadd.f32 %v401, %v528
  %v530 = vpop.f32.mrb[0].mxu0
  %531 = vmatprep.mubr.bf16.mxu0 0
  %532 = vmatmul.mubr.bf16.gmra.mrb[0].mxu0 %v370
  %v533 = vpop.f32.mrb[0].mxu0
  %v534 = vadd.f32 %v401, %v533
  %v535 = vpop.f32.mrb[0].mxu0
  %v536 = vpop.f32.mrb[0].mxu0
  %v537 = vadd.f32 %v401, %v536
  %v538 = vpop.f32.mrb[0].mxu0
  %539 = vmatprep.mubr.bf16.mxu0 0
  %540 = vmatmul.mubr.bf16.gmra.mrb[0].mxu0 %v371
  %v541 = vpop.f32.mrb[0].mxu0
  %v542 = vadd.f32 %v401, %v541
  %v543 = vpop.f32.mrb[0].mxu0
  %v544 = vpop.f32.mrb[0].mxu0
  %v545 = vadd.f32 %v401, %v544
  %v546 = vpop.f32.mrb[0].mxu0
  %547 = vmatprep.mubr.bf16.mxu0 0
  %548 = vmatmul.mubr.bf16.gmra.mrb[0].mxu0 %v372
  %v549 = vpop.f32.mrb[0].mxu0
  %v550 = vadd.f32 %v401, %v549
  %v551 = vpop.f32.mrb[0].mxu0
  %v552 = vpop.f32.mrb[0].mxu0
  %v553 = vadd.f32 %v401, %v552
  %v554 = vpop.f32.mrb[0].mxu0
  %555 = vmatprep.mubr.bf16.mxu0 0
  %556 = vmatmul.mubr.bf16.gmra.mrb[0].mxu0 %v373
  %v557 = vpop.f32.mrb[0].mxu0
  %v558 = vadd.f32 %v401, %v557
  %v559 = vpop.f32.mrb[0].mxu0
  %v560 = vpop.f32.mrb[0].mxu0
  %v561 = vadd.f32 %v401, %v560
  %v562 = vpop.f32.mrb[0].mxu0
  %563 = vmatprep.mubr.bf16.mxu0 0
  %564 = vmatmul.mubr.bf16.gmra.mrb[0].mxu0 %v374
  %v565 = vpop.f32.mrb[0].mxu0
  %v566 = vadd.f32 %v401, %v565
  %v567 = vpop.f32.mrb[0].mxu0
  %v568 = vpop.f32.mrb[0].mxu0
  %v569 = vadd.f32 %v401, %v568
  %v570 = vpop.f32.mrb[0].mxu0
  %571 = vmatprep.mubr.bf16.mxu0 0
  %572 = vmatmul.mubr.bf16.gmra.mrb[0].mxu0 %v375
  %v573 = vpop.f32.mrb[0].mxu0
  %v574 = vadd.f32 %v401, %v573
  %v575 = vpop.f32.mrb[0].mxu0
  %v576 = vpop.f32.mrb[0].mxu0
  %v577 = vadd.f32 %v401, %v576
  %v578 = vpop.f32.mrb[0].mxu0
  %579 = vmatprep.mubr.bf16.mxu0 0
  %580 = vmatmul.mubr.bf16.gmra.mrb[0].mxu0 %v376
  %v581 = vpop.f32.mrb[0].mxu0
  %v582 = vadd.f32 %v401, %v581
  %v583 = vpop.f32.mrb[0].mxu0
  %v584 = vpop.f32.mrb[0].mxu0
  %v585 = vadd.f32 %v401, %v584
  %v586 = vpop.f32.mrb[0].mxu0
  %587 = vmatprep.mubr.bf16.mxu0 0
  %588 = vmatmul.mubr.bf16.gmra.mrb[0].mxu0 %v377
  %v589 = vpop.f32.mrb[0].mxu0
  %v590 = vadd.f32 %v401, %v589
  %v591 = vpop.f32.mrb[0].mxu0
  %v592 = vpop.f32.mrb[0].mxu0
  %v593 = vadd.f32 %v401, %v592
  %v594 = vpop.f32.mrb[0].mxu0
  %595 = vmatprep.mubr.bf16.mxu0 0
  %596 = vmatmul.mubr.bf16.gmra.mrb[0].mxu0 %v378
  %v597 = vpop.f32.mrb[0].mxu0
  %v598 = vadd.f32 %v401, %v597
  %v599 = vpop.f32.mrb[0].mxu0
  %v600 = vpop.f32.mrb[0].mxu0
  %v601 = vadd.f32 %v401, %v600
  %v602 = vpop.f32.mrb[0].mxu0
  %603 = vmatprep.mubr.bf16.mxu0 0
  %604 = vmatmul.mubr.bf16.gmra.mrb[0].mxu0 %v379
  %v605 = vpop.f32.mrb[0].mxu0
  %v606 = vadd.f32 %v401, %v605
  %v607 = vpop.f32.mrb[0].mxu0
  %v608 = vpop.f32.mrb[0].mxu0
  %v609 = vadd.f32 %v401, %v608
  %v610 = vpop.f32.mrb[0].mxu0
  %611 = vdwg.mxu0
  %v612 = vmax.f32 %v486, 0.0
  %v613 = vmax.f32 %v489, 0.0
  %v614 = vmax.f32 %v494, 0.0
  %v615 = vmax.f32 %v497, 0.0
  %v616 = vmax.f32 %v502, 0.0
  %v617 = vmax.f32 %v505, 0.0
  %v618 = vmax.f32 %v510, 0.0
  %v619 = vmax.f32 %v513, 0.0
  %v620 = vmax.f32 %v518, 0.0
  %v621 = vmax.f32 %v521, 0.0
  %v622 = vmax.f32 %v526, 0.0
  %v623 = vmax.f32 %v529, 0.0
  %v624 = vmax.f32 %v534, 0.0
  %v625 = vmax.f32 %v537, 0.0
  %v626 = vmax.f32 %v542, 0.0
  %v627 = vmax.f32 %v545, 0.0
  %v628 = vmax.f32 %v550, 0.0
  %v629 = vmax.f32 %v553, 0.0
  %v630 = vmax.f32 %v558, 0.0
  %v631 = vmax.f32 %v561, 0.0
  %v632 = vmax.f32 %v566, 0.0
  %v633 = vmax.f32 %v569, 0.0
  %v634 = vmax.f32 %v574, 0.0
  %v635 = vmax.f32 %v577, 0.0
  %v636 = vmax.f32 %v582, 0.0
  %v637 = vmax.f32 %v585, 0.0
  %v638 = vmax.f32 %v590, 0.0
  %v639 = vmax.f32 %v593, 0.0
  %v640 = vmax.f32 %v598, 0.0
  %v641 = vmax.f32 %v601, 0.0
  %v642 = vmax.f32 %v606, 0.0
  %v643 = vmax.f32 %v609, 0.0
  %v644 = vpack.c.bf16 %v613, %v612
  %v645 = vpack.c.bf16 %v615, %v614
  %v646 = vpack.c.bf16 %v617, %v616
  %v647 = vpack.c.bf16 %v619, %v618
  %v648 = vpack.c.bf16 %v621, %v620
  %v649 = vpack.c.bf16 %v623, %v622
  %v650 = vpack.c.bf16 %v625, %v624
  %v651 = vpack.c.bf16 %v627, %v626
  %v652 = vpack.c.bf16 %v629, %v628
  %v653 = vpack.c.bf16 %v631, %v630
  %v654 = vpack.c.bf16 %v633, %v632
  %v655 = vpack.c.bf16 %v635, %v634
  %v656 = vpack.c.bf16 %v637, %v636
  %v657 = vpack.c.bf16 %v639, %v638
  %v658 = vpack.c.bf16 %v641, %v640
  %v659 = vpack.c.bf16 %v643, %v642
  %v660 = vld [vmem:[%s5] sm:$0xf]
  %v661 = vld [vmem:[%s5 + $0x4] sm:$0xf]
  %v662 = vld [vmem:[%s5 + $0x8] sm:$0xf]
  %v663 = vld [vmem:[%s5 + $0xc] sm:$0xf]
  %v664 = vld [vmem:[%s5 + $0x10] sm:$0xf]
  %v665 = vld [vmem:[%s5 + $0x14] sm:$0xf]
  %v666 = vld [vmem:[%s5 + $0x18] sm:$0xf]
  %v667 = vld [vmem:[%s5 + $0x1c] sm:$0xf]
  %v668 = vld [vmem:[%s5 + $0x20] sm:$0xf]
  %v669 = vld [vmem:[%s5 + $0x24] sm:$0xf]
  %v670 = vld [vmem:[%s5 + $0x28] sm:$0xf]
  %v671 = vld [vmem:[%s5 + $0x2c] sm:$0xf]
  %v672 = vld [vmem:[%s5 + $0x30] sm:$0xf]
  %v673 = vld [vmem:[%s5 + $0x34] sm:$0xf]
  %v674 = vld [vmem:[%s5 + $0x38] sm:$0xf]
  %v675 = vld [vmem:[%s5 + $0x3c] sm:$0xf]
  %v676 = vld [vmem:[%s6] sm:$0x1]
  %v678 = vlaneseq
  %v679 = vshrl.u32 %v678, 7
  %v680 = vsub.s32 0, %v679
  %v681 = vrot.slane %v676, %v680
  %v699 = vunpack.c.l.b16 %v660
  %v700 = vunpack.c.l.b16 %v661
  %v701 = vunpack.c.l.b16 %v662
  %v702 = vunpack.c.l.b16 %v663
  %v703 = vunpack.c.l.b16 %v664
  %v704 = vunpack.c.l.b16 %v665
  %v705 = vunpack.c.l.b16 %v666
  %v706 = vunpack.c.l.b16 %v667
  %v707 = vunpack.c.l.b16 %v668
  %v708 = vunpack.c.l.b16 %v669
  %v709 = vunpack.c.l.b16 %v670
  %v710 = vunpack.c.l.b16 %v671
  %v711 = vunpack.c.l.b16 %v672
  %v712 = vunpack.c.l.b16 %v673
  %v713 = vunpack.c.l.b16 %v674
  %v714 = vunpack.c.l.b16 %v675
  %v715 = vpack.c.b16 %v700, %v699
  %v716 = vpack.c.b16 %v702, %v701
  %v717 = vpack.c.b16 %v704, %v703
  %v718 = vpack.c.b16 %v706, %v705
  %v719 = vpack.c.b16 %v708, %v707
  %v720 = vpack.c.b16 %v710, %v709
  %v721 = vpack.c.b16 %v712, %v711
  %v722 = vpack.c.b16 %v714, %v713
  %731 = vmatprep.subr.bf16.mxu0 0
  %732 = vmatpush1.bf16.msra.mxu0 %v715
  %733 = vmatprep.subr.bf16.mxu0 0
  %734 = vmatpush1.bf16.msra.mxu0 %v716
  %735 = vmatprep.subr.bf16.mxu0 0
  %736 = vmatpush1.bf16.msra.mxu0 %v717
  %737 = vmatprep.subr.bf16.mxu0 0
  %738 = vmatpush1.bf16.msra.mxu0 %v718
  %739 = vmatprep.subr.bf16.mxu0 0
  %740 = vmatpush1.bf16.msra.mxu0 %v719
  %741 = vmatprep.subr.bf16.mxu0 0
  %742 = vmatpush1.bf16.msra.mxu0 %v720
  %743 = vmatprep.subr.bf16.mxu0 0
  %744 = vmatpush1.bf16.msra.mxu0 %v721
  %745 = vmatprep.subr.bf16.mxu0 0
  %746 = vmatpush1.bf16.msra.mxu0 %v722
  %747 = vmatprep.subr.bf16.mxu0 0
  %748 = vmatpush1.bf16.msra.mxu0 0
  %749 = vmatprep.subr.bf16.mxu0 0
  %750 = vmatpush1.bf16.msra.mxu0 0
  %751 = vmatprep.subr.bf16.mxu0 0
  %752 = vmatpush1.bf16.msra.mxu0 0
  %753 = vmatprep.subr.bf16.mxu0 0
  %754 = vmatpush1.bf16.msra.mxu0 0
  %755 = vmatprep.subr.bf16.mxu0 0
  %756 = vmatpush1.bf16.msra.mxu0 0
  %757 = vmatprep.subr.bf16.mxu0 0
  %758 = vmatpush1.bf16.msra.mxu0 0
  %759 = vmatprep.subr.bf16.mxu0 0
  %760 = vmatpush1.bf16.msra.mxu0 0
  %761 = vmatprep.subr.bf16.mxu0 0
  %762 = vmatpush1.bf16.msra.mxu0 0
  %763 = vmatprep.mubr.bf16.mxu0 0
  %764 = vmatmul.mubr.bf16.gmra.mrb[0].mxu0 %v644
  %v765 = vpop.f32.mrb[0].mxu0
  %v766 = vadd.f32 %v681, %v765
  %v767 = vpop.f32.mrb[0].mxu0
  %v768 = vpop.f32.mrb[0].mxu0
  %v769 = vadd.f32 %v681, %v768
  %v770 = vpop.f32.mrb[0].mxu0
  %771 = vmatprep.mubr.bf16.mxu0 0
  %772 = vmatmul.mubr.bf16.gmra.mrb[0].mxu0 %v645
  %v773 = vpop.f32.mrb[0].mxu0
  %v774 = vadd.f32 %v681, %v773
  %v775 = vpop.f32.mrb[0].mxu0
  %v776 = vpop.f32.mrb[0].mxu0
  %v777 = vadd.f32 %v681, %v776
  %v778 = vpop.f32.mrb[0].mxu0
  %779 = vmatprep.mubr.bf16.mxu0 0
  %780 = vmatmul.mubr.bf16.gmra.mrb[0].mxu0 %v646
  %v781 = vpop.f32.mrb[0].mxu0
  %v782 = vadd.f32 %v681, %v781
  %v783 = vpop.f32.mrb[0].mxu0
  %v784 = vpop.f32.mrb[0].mxu0
  %v785 = vadd.f32 %v681, %v784
  %v786 = vpop.f32.mrb[0].mxu0
  %787 = vmatprep.mubr.bf16.mxu0 0
  %788 = vmatmul.mubr.bf16.gmra.mrb[0].mxu0 %v647
  %v789 = vpop.f32.mrb[0].mxu0
  %v790 = vadd.f32 %v681, %v789
  %v791 = vpop.f32.mrb[0].mxu0
  %v792 = vpop.f32.mrb[0].mxu0
  %v793 = vadd.f32 %v681, %v792
  %v794 = vpop.f32.mrb[0].mxu0
  %795 = vmatprep.mubr.bf16.mxu0 0
  %796 = vmatmul.mubr.bf16.gmra.mrb[0].mxu0 %v648
  %v797 = vpop.f32.mrb[0].mxu0
  %v798 = vadd.f32 %v681, %v797
  %v799 = vpop.f32.mrb[0].mxu0
  %v800 = vpop.f32.mrb[0].mxu0
  %v801 = vadd.f32 %v681, %v800
  %v802 = vpop.f32.mrb[0].mxu0
  %803 = vmatprep.mubr.bf16.mxu0 0
  %804 = vmatmul.mubr.bf16.gmra.mrb[0].mxu0 %v649
  %v805 = vpop.f32.mrb[0].mxu0
  %v806 = vadd.f32 %v681, %v805
  %v807 = vpop.f32.mrb[0].mxu0
  %v808 = vpop.f32.mrb[0].mxu0
  %v809 = vadd.f32 %v681, %v808
  %v810 = vpop.f32.mrb[0].mxu0
  %811 = vmatprep.mubr.bf16.mxu0 0
  %812 = vmatmul.mubr.bf16.gmra.mrb[0].mxu0 %v650
  %v813 = vpop.f32.mrb[0].mxu0
  %v814 = vadd.f32 %v681, %v813
  %v815 = vpop.f32.mrb[0].mxu0
  %v816 = vpop.f32.mrb[0].mxu0
  %v817 = vadd.f32 %v681, %v816
  %v818 = vpop.f32.mrb[0].mxu0
  %819 = vmatprep.mubr.bf16.mxu0 0
  %820 = vmatmul.mubr.bf16.gmra.mrb[0].mxu0 %v651
  %v821 = vpop.f32.mrb[0].mxu0
  %v822 = vadd.f32 %v681, %v821
  %v823 = vpop.f32.mrb[0].mxu0
  %v824 = vpop.f32.mrb[0].mxu0
  %v825 = vadd.f32 %v681, %v824
  %v826 = vpop.f32.mrb[0].mxu0
  %827 = vmatprep.mubr.bf16.mxu0 0
  %828 = vmatmul.mubr.bf16.gmra.mrb[0].mxu0 %v652
  %v829 = vpop.f32.mrb[0].mxu0
  %v830 = vadd.f32 %v681, %v829
  %v831 = vpop.f32.mrb[0].mxu0
  %v832 = vpop.f32.mrb[0].mxu0
  %v833 = vadd.f32 %v681, %v832
  %v834 = vpop.f32.mrb[0].mxu0
  %835 = vmatprep.mubr.bf16.mxu0 0
  %836 = vmatmul.mubr.bf16.gmra.mrb[0].mxu0 %v653
  %v837 = vpop.f32.mrb[0].mxu0
  %v838 = vadd.f32 %v681, %v837
  %v839 = vpop.f32.mrb[0].mxu0
  %v840 = vpop.f32.mrb[0].mxu0
  %v841 = vadd.f32 %v681, %v840
  %v842 = vpop.f32.mrb[0].mxu0
  %843 = vmatprep.mubr.bf16.mxu0 0
  %844 = vmatmul.mubr.bf16.gmra.mrb[0].mxu0 %v654
  %v845 = vpop.f32.mrb[0].mxu0
  %v846 = vadd.f32 %v681, %v845
  %v847 = vpop.f32.mrb[0].mxu0
  %v848 = vpop.f32.mrb[0].mxu0
  %v849 = vadd.f32 %v681, %v848
  %v850 = vpop.f32.mrb[0].mxu0
  %851 = vmatprep.mubr.bf16.mxu0 0
  %852 = vmatmul.mubr.bf16.gmra.mrb[0].mxu0 %v655
  %v853 = vpop.f32.mrb[0].mxu0
  %v854 = vadd.f32 %v681, %v853
  %v855 = vpop.f32.mrb[0].mxu0
  %v856 = vpop.f32.mrb[0].mxu0
  %v857 = vadd.f32 %v681, %v856
  %v858 = vpop.f32.mrb[0].mxu0
  %859 = vmatprep.mubr.bf16.mxu0 0
  %860 = vmatmul.mubr.bf16.gmra.mrb[0].mxu0 %v656
  %v861 = vpop.f32.mrb[0].mxu0
  %v862 = vadd.f32 %v681, %v861
  %v863 = vpop.f32.mrb[0].mxu0
  %v864 = vpop.f32.mrb[0].mxu0
  %v865 = vadd.f32 %v681, %v864
  %v866 = vpop.f32.mrb[0].mxu0
  %867 = vmatprep.mubr.bf16.mxu0 0
  %868 = vmatmul.mubr.bf16.gmra.mrb[0].mxu0 %v657
  %v869 = vpop.f32.mrb[0].mxu0
  %v870 = vadd.f32 %v681, %v869
  %v871 = vpop.f32.mrb[0].mxu0
  %v872 = vpop.f32.mrb[0].mxu0
  %v873 = vadd.f32 %v681, %v872
  %v874 = vpop.f32.mrb[0].mxu0
  %875 = vmatprep.mubr.bf16.mxu0 0
  %876 = vmatmul.mubr.bf16.gmra.mrb[0].mxu0 %v658
  %v877 = vpop.f32.mrb[0].mxu0
  %v878 = vadd.f32 %v681, %v877
  %v879 = vpop.f32.mrb[0].mxu0
  %v880 = vpop.f32.mrb[0].mxu0
  %v881 = vadd.f32 %v681, %v880
  %v882 = vpop.f32.mrb[0].mxu0
  %883 = vmatprep.mubr.bf16.mxu0 0
  %884 = vmatmul.mubr.bf16.gmra.mrb[0].mxu0 %v659
  %v885 = vpop.f32.mrb[0].mxu0
  %v886 = vadd.f32 %v681, %v885
  %v887 = vpop.f32.mrb[0].mxu0
  %v888 = vpop.f32.mrb[0].mxu0
  %v889 = vadd.f32 %v681, %v888
  %v890 = vpop.f32.mrb[0].mxu0
  %891 = vdwg.mxu0
  %v892 = vmax.f32 %v766, 0.0
  %v893 = vmax.f32 %v769, 0.0
  %v894 = vmax.f32 %v774, 0.0
  %v895 = vmax.f32 %v777, 0.0
  %v896 = vmax.f32 %v782, 0.0
  %v897 = vmax.f32 %v785, 0.0
  %v898 = vmax.f32 %v790, 0.0
  %v899 = vmax.f32 %v793, 0.0
  %v900 = vmax.f32 %v798, 0.0
  %v901 = vmax.f32 %v801, 0.0
  %v902 = vmax.f32 %v806, 0.0
  %v903 = vmax.f32 %v809, 0.0
  %v904 = vmax.f32 %v814, 0.0
  %v905 = vmax.f32 %v817, 0.0
  %v906 = vmax.f32 %v822, 0.0
  %v907 = vmax.f32 %v825, 0.0
  %v908 = vmax.f32 %v830, 0.0
  %v909 = vmax.f32 %v833, 0.0
  %v910 = vmax.f32 %v838, 0.0
  %v911 = vmax.f32 %v841, 0.0
  %v912 = vmax.f32 %v846, 0.0
  %v913 = vmax.f32 %v849, 0.0
  %v914 = vmax.f32 %v854, 0.0
  %v915 = vmax.f32 %v857, 0.0
  %v916 = vmax.f32 %v862, 0.0
  %v917 = vmax.f32 %v865, 0.0
  %v918 = vmax.f32 %v870, 0.0
  %v919 = vmax.f32 %v873, 0.0
  %v920 = vmax.f32 %v878, 0.0
  %v921 = vmax.f32 %v881, 0.0
  %v922 = vmax.f32 %v886, 0.0
  %v923 = vmax.f32 %v889, 0.0
  %v924 = vld [vmem:[%s7] sm:$0x1]
  %v926 = vlaneseq
  %v927 = vshrl.u32 %v926, 7
  %v928 = vsub.s32 0, %v927
  %v929 = vrot.slane %v924, %v928
  %v931 = vmul.f32 %v892, %v929
  %v932 = vmul.f32 %v893, %v929
  %v933 = vmul.f32 %v894, %v929
  %v934 = vmul.f32 %v895, %v929
  %v935 = vmul.f32 %v896, %v929
  %v936 = vmul.f32 %v897, %v929
  %v937 = vmul.f32 %v898, %v929
  %v938 = vmul.f32 %v899, %v929
  %v939 = vmul.f32 %v900, %v929
  %v940 = vmul.f32 %v901, %v929
  %v941 = vmul.f32 %v902, %v929
  %v942 = vmul.f32 %v903, %v929
  %v943 = vmul.f32 %v904, %v929
  %v944 = vmul.f32 %v905, %v929
  %v945 = vmul.f32 %v906, %v929
  %v946 = vmul.f32 %v907, %v929
  %v947 = vmul.f32 %v908, %v929
  %v948 = vmul.f32 %v909, %v929
  %v949 = vmul.f32 %v910, %v929
  %v950 = vmul.f32 %v911, %v929
  %v951 = vmul.f32 %v912, %v929
  %v952 = vmul.f32 %v913, %v929
  %v953 = vmul.f32 %v914, %v929
  %v954 = vmul.f32 %v915, %v929
  %v955 = vmul.f32 %v916, %v929
  %v956 = vmul.f32 %v917, %v929
  %v957 = vmul.f32 %v918, %v929
  %v958 = vmul.f32 %v919, %v929
  %v959 = vmul.f32 %v920, %v929
  %v960 = vmul.f32 %v921, %v929
  %v961 = vmul.f32 %v922, %v929
  %v962 = vmul.f32 %v923, %v929
  %963 = vadd.xlane.f32.xlu0 %v931
  %v964 = vpop.xlane.xlu0 %963
  %965 = vadd.xlane.f32.xlu0 %v932
  %v966 = vpop.xlane.xlu0 %965
  %967 = vadd.xlane.f32.xlu0 %v933
  %v968 = vpop.xlane.xlu0 %967
  %969 = vadd.xlane.f32.xlu0 %v934
  %v970 = vpop.xlane.xlu0 %969
  %971 = vadd.xlane.f32.xlu0 %v935
  %v972 = vpop.xlane.xlu0 %971
  %973 = vadd.xlane.f32.xlu0 %v936
  %v974 = vpop.xlane.xlu0 %973
  %975 = vadd.xlane.f32.xlu0 %v937
  %v976 = vpop.xlane.xlu0 %975
  %977 = vadd.xlane.f32.xlu0 %v938
  %v978 = vpop.xlane.xlu0 %977
  %979 = vadd.xlane.f32.xlu0 %v939
  %v980 = vpop.xlane.xlu0 %979
  %981 = vadd.xlane.f32.xlu0 %v940
  %v982 = vpop.xlane.xlu0 %981
  %983 = vadd.xlane.f32.xlu0 %v941
  %v984 = vpop.xlane.xlu0 %983
  %985 = vadd.xlane.f32.xlu0 %v942
  %v986 = vpop.xlane.xlu0 %985
  %987 = vadd.xlane.f32.xlu0 %v943
  %v988 = vpop.xlane.xlu0 %987
  %989 = vadd.xlane.f32.xlu0 %v944
  %v990 = vpop.xlane.xlu0 %989
  %991 = vadd.xlane.f32.xlu0 %v945
  %v992 = vpop.xlane.xlu0 %991
  %993 = vadd.xlane.f32.xlu0 %v946
  %v994 = vpop.xlane.xlu0 %993
  %995 = vadd.xlane.f32.xlu0 %v947
  %v996 = vpop.xlane.xlu0 %995
  %997 = vadd.xlane.f32.xlu0 %v948
  %v998 = vpop.xlane.xlu0 %997
  %999 = vadd.xlane.f32.xlu0 %v949
  %v1000 = vpop.xlane.xlu0 %999
  %1001 = vadd.xlane.f32.xlu0 %v950
  %v1002 = vpop.xlane.xlu0 %1001
  %1003 = vadd.xlane.f32.xlu0 %v951
  %v1004 = vpop.xlane.xlu0 %1003
  %1005 = vadd.xlane.f32.xlu0 %v952
  %v1006 = vpop.xlane.xlu0 %1005
  %1007 = vadd.xlane.f32.xlu0 %v953
  %v1008 = vpop.xlane.xlu0 %1007
  %1009 = vadd.xlane.f32.xlu0 %v954
  %v1010 = vpop.xlane.xlu0 %1009
  %1011 = vadd.xlane.f32.xlu0 %v955
  %v1012 = vpop.xlane.xlu0 %1011
  %1013 = vadd.xlane.f32.xlu0 %v956
  %v1014 = vpop.xlane.xlu0 %1013
  %1015 = vadd.xlane.f32.xlu0 %v957
  %v1016 = vpop.xlane.xlu0 %1015
  %1017 = vadd.xlane.f32.xlu0 %v958
  %v1018 = vpop.xlane.xlu0 %1017
  %1019 = vadd.xlane.f32.xlu0 %v959
  %v1020 = vpop.xlane.xlu0 %1019
  %1021 = vadd.xlane.f32.xlu0 %v960
  %v1022 = vpop.xlane.xlu0 %1021
  %1023 = vadd.xlane.f32.xlu0 %v961
  %v1024 = vpop.xlane.xlu0 %1023
  %1025 = vadd.xlane.f32.xlu0 %v962
  %v1026 = vpop.xlane.xlu0 %1025
  %v1027 = vld [vmem:[#allocation2] sm:$0x1]
  %v1029 = vlaneseq
  %v1030 = vshrl.u32 %v1029, 7
  %v1031 = vsub.s32 0, %v1030
  %v1032 = vrot.slane %v1027, %v1031
  %v1034 = vadd.f32 %v964, %v1032
  %v1035 = vadd.f32 %v966, %v1032
  %v1036 = vadd.f32 %v968, %v1032
  %v1037 = vadd.f32 %v970, %v1032
  %v1038 = vadd.f32 %v972, %v1032
  %v1039 = vadd.f32 %v974, %v1032
  %v1040 = vadd.f32 %v976, %v1032
  %v1041 = vadd.f32 %v978, %v1032
  %v1042 = vadd.f32 %v980, %v1032
  %v1043 = vadd.f32 %v982, %v1032
  %v1044 = vadd.f32 %v984, %v1032
  %v1045 = vadd.f32 %v986, %v1032
  %v1046 = vadd.f32 %v988, %v1032
  %v1047 = vadd.f32 %v990, %v1032
  %v1048 = vadd.f32 %v992, %v1032
  %v1049 = vadd.f32 %v994, %v1032
  %v1050 = vadd.f32 %v996, %v1032
  %v1051 = vadd.f32 %v998, %v1032
  %v1052 = vadd.f32 %v1000, %v1032
  %v1053 = vadd.f32 %v1002, %v1032
  %v1054 = vadd.f32 %v1004, %v1032
  %v1055 = vadd.f32 %v1006, %v1032
  %v1056 = vadd.f32 %v1008, %v1032
  %v1057 = vadd.f32 %v1010, %v1032
  %v1058 = vadd.f32 %v1012, %v1032
  %v1059 = vadd.f32 %v1014, %v1032
  %v1060 = vadd.f32 %v1016, %v1032
  %v1061 = vadd.f32 %v1018, %v1032
  %v1062 = vadd.f32 %v1020, %v1032
  %v1063 = vadd.f32 %v1022, %v1032
  %v1064 = vadd.f32 %v1024, %v1032
  %v1065 = vadd.f32 %v1026, %v1032
  %vm1066 = vcmask 7168
  %1067 = vst.msk [vmem:[%s9] sm:$0xff] %vm1066, %v1034
  %1068 = vst.msk [vmem:[%s9 + $0x8] sm:$0xff] %vm1066, %v1035
  %1069 = vst.msk [vmem:[%s9 + $0x10] sm:$0xff] %vm1066, %v1036
  %1070 = vst.msk [vmem:[%s9 + $0x18] sm:$0xff] %vm1066, %v1037
  %1071 = vst.msk [vmem:[%s9 + $0x20] sm:$0xff] %vm1066, %v1038
  %1072 = vst.msk [vmem:[%s9 + $0x28] sm:$0xff] %vm1066, %v1039
  %1073 = vst.msk [vmem:[%s9 + $0x30] sm:$0xff] %vm1066, %v1040
  %1074 = vst.msk [vmem:[%s9 + $0x38] sm:$0xff] %vm1066, %v1041
  %1075 = vst.msk [vmem:[%s9 + $0x40] sm:$0xff] %vm1066, %v1042
  %1076 = vst.msk [vmem:[%s9 + $0x48] sm:$0xff] %vm1066, %v1043
  %1077 = vst.msk [vmem:[%s9 + $0x50] sm:$0xff] %vm1066, %v1044
  %1078 = vst.msk [vmem:[%s9 + $0x58] sm:$0xff] %vm1066, %v1045
  %1079 = vst.msk [vmem:[%s9 + $0x60] sm:$0xff] %vm1066, %v1046
  %1080 = vst.msk [vmem:[%s9 + $0x68] sm:$0xff] %vm1066, %v1047
  %1081 = vst.msk [vmem:[%s9 + $0x70] sm:$0xff] %vm1066, %v1048
  %1082 = vst.msk [vmem:[%s9 + $0x78] sm:$0xff] %vm1066, %v1049
  %1083 = vst.msk [vmem:[%s9 + $0x80] sm:$0xff] %vm1066, %v1050
  %1084 = vst.msk [vmem:[%s9 + $0x88] sm:$0xff] %vm1066, %v1051
  %1085 = vst.msk [vmem:[%s9 + $0x90] sm:$0xff] %vm1066, %v1052
  %1086 = vst.msk [vmem:[%s9 + $0x98] sm:$0xff] %vm1066, %v1053
  %1087 = vst.msk [vmem:[%s9 + $0xa0] sm:$0xff] %vm1066, %v1054
  %1088 = vst.msk [vmem:[%s9 + $0xa8] sm:$0xff] %vm1066, %v1055
  %1089 = vst.msk [vmem:[%s9 + $0xb0] sm:$0xff] %vm1066, %v1056
  %1090 = vst.msk [vmem:[%s9 + $0xb8] sm:$0xff] %vm1066, %v1057
  %1091 = vst.msk [vmem:[%s9 + $0xc0] sm:$0xff] %vm1066, %v1058
  %1092 = vst.msk [vmem:[%s9 + $0xc8] sm:$0xff] %vm1066, %v1059
  %1093 = vst.msk [vmem:[%s9 + $0xd0] sm:$0xff] %vm1066, %v1060
  %1094 = vst.msk [vmem:[%s9 + $0xd8] sm:$0xff] %vm1066, %v1061
  %1095 = vst.msk [vmem:[%s9 + $0xe0] sm:$0xff] %vm1066, %v1062
  %1096 = vst.msk [vmem:[%s9 + $0xe8] sm:$0xff] %vm1066, %v1063
  %1097 = vst.msk [vmem:[%s9 + $0xf0] sm:$0xff] %vm1066, %v1064
  %1098 = vst.msk [vmem:[%s9 + $0xf8] sm:$0xff] %vm1066, %v1065
  // Predicated region
  $region38: #{tpu_custom_call.1} parent=0 // pred_check
    _
  $region39: #{tpu_custom_call.1} parent=0 // pred_check_branch
    %1100 = sbr.rel (0) target = $region41
  $region40: #{tpu_custom_call.1} parent=0 // pred_region
    _
  $region41: #{tpu_custom_call.1} parent=0 // pred_fallthru
    _
  // Predicated region
  $region42: #{tpu_custom_call.1} parent=0 // pred_check
    _
  $region43: #{tpu_custom_call.1} parent=0 // pred_check_branch
    %1102 = sbr.rel (0) target = $region45
  $region44: #{tpu_custom_call.1} parent=0 // pred_region
    _
  $region45: #{tpu_custom_call.1} parent=0 // pred_fallthru
    _

</llo_original>
